<compile_context>
chip_gen: v6e
topology: v6e:2x2x1
jax: 0.10.0
libtpu: 0.0.40
codegen_flags: <defaults>
</compile_context>

<pallas_src>
import jax
import jax.numpy as jnp
from jax.experimental import pallas as pl
from jax.experimental.pallas import tpu as pltpu


def _round_up(x, m):
    return ((x + m - 1) // m) * m


def dqn_kernel(s_ref, a_ref, w1_ref, b1_ref, w2_ref, b2_ref, w3_ref, b3_ref,
               o_ref, x_ref):
    """Fused 3-layer MLP on one batch tile.

    s_ref:(tb,obs) bf16   a_ref:(tb,act) bf16   x_ref:(tb,obs+act) bf16 scratch
    w1_ref:(obs+act,H) bf16   w2_ref:(H,H) bf16   b1_ref,b2_ref:(1,H) f32
    w3_ref:(1,H) f32          b3_ref:(1,) f32 in SMEM   o_ref:(tb,1) f32
    """
    obs = s_ref.shape[1]
    # hstack((state, action)) assembled in VMEM (two masked lane-range stores).
    x_ref[:, :obs] = s_ref[...]
    x_ref[:, obs:] = a_ref[...]

    # Layer 1: single K = obs+act bf16 matmul on the MXU, f32 accumulate.
    h1 = jnp.dot(x_ref[...], w1_ref[...],
                 preferred_element_type=jnp.float32) + b1_ref[...]
    h1 = jnp.maximum(h1, 0.0)                                      # ReLU (f32)

    # Layer 2.
    h2 = jnp.dot(h1.astype(jnp.bfloat16), w2_ref[...],
                 preferred_element_type=jnp.float32) + b2_ref[...]
    h2 = jnp.maximum(h2, 0.0)                                      # ReLU (f32)

    # Layer 3 (H -> 1): VPU multiply + cross-lane reduce instead of an MXU
    # matmul with 1/128 column utilization.
    q = jnp.sum(h2 * w3_ref[...], axis=-1, keepdims=True) + b3_ref[0]
    o_ref[...] = q                                                 # (tb, 1) f32


def dqn_forward(state, action, params, *, block_batch=4096):
    """Batch-tiled fused MLP; state/action stay separate in HBM (no XLA concat)."""
    w1, b1, w2, b2, w3_row, b3 = params
    batch, obs = state.shape
    act = action.shape[1]
    in_dim = obs + act
    hidden = w1.shape[1]

    # MXU inputs in bf16 (f32 accumulate in-kernel); biases / final layer f32.
    state_bf = state.astype(jnp.bfloat16)
    action_bf = action.astype(jnp.bfloat16)
    w1_bf = w1.astype(jnp.bfloat16)
    w2_bf = w2.astype(jnp.bfloat16)
    b1 = b1.astype(jnp.float32)
    b2 = b2.astype(jnp.float32)
    w3_row = w3_row.astype(jnp.float32)
    b3 = b3.astype(jnp.float32)

    # Batch tiling: large tiles (multiples of 8) amortize per-step overhead,
    # but use at least two (and an even number of) tiles when the batch allows
    # so both v7x TensorCores get work.
    batch8 = _round_up(batch, 8)
    num_tiles = pl.cdiv(batch8, block_batch)
    if batch8 >= 16:
        num_tiles = max(num_tiles, 2)
        num_tiles += num_tiles % 2
    tb = _round_up(pl.cdiv(batch8, num_tiles), 8)
    num_tiles = pl.cdiv(batch, tb)
    grid = (num_tiles,)

    def row_spec(cols):        # streamed per-tile along the batch axis
        return pl.BlockSpec((tb, cols), lambda i: (i, 0))

    def resident(shape):       # constant index_map -> stays in VMEM across steps
        return pl.BlockSpec(shape, lambda i: (0, 0))

    cost = pl.CostEstimate(
        flops=2 * batch * (in_dim * hidden + hidden * hidden + hidden),
        transcendentals=0,
        bytes_accessed=(batch * in_dim * 2 + batch * 4
                        + (in_dim * hidden + hidden * hidden) * 2
                        + (3 * hidden + 1) * 4),
    )

    return pl.pallas_call(
        dqn_kernel,
        out_shape=jax.ShapeDtypeStruct((batch, 1), jnp.float32),
        grid=grid,
        in_specs=[
            row_spec(obs),                        # state tile (bf16)
            row_spec(act),                        # action tile (bf16)
            resident((in_dim, hidden)),           # fused W1 (bf16)
            resident((1, hidden)),                # b1 (f32)
            resident((hidden, hidden)),           # W2 (bf16)
            resident((1, hidden)),                # b2 (f32)
            resident((1, hidden)),                # W3 as a row (f32, VPU path)
            pl.BlockSpec(memory_space=pltpu.MemorySpace.SMEM),  # b3 scalar
        ],
        out_specs=row_spec(1),
        scratch_shapes=[pltpu.VMEM((tb, in_dim), jnp.bfloat16)],  # x-tile
        compiler_params=pltpu.CompilerParams(
            dimension_semantics=("parallel",),    # megacore split on v7x
        ),
        cost_estimate=cost,
    )(state_bf, action_bf, w1_bf, b1, w2_bf, b2, w3_row, b3)


def init_params(key, obs_size, out_dims, hidden_size):
    """PyTorch nn.Linear-style init; W stored (in_features, out_features)."""
    def linear(k, fan_in, fan_out):
        kw, kb = jax.random.split(k)
        bound = 1.0 / jnp.sqrt(fan_in)
        w = jax.random.uniform(kw, (fan_in, fan_out), jnp.float32, -bound, bound)
        b = jax.random.uniform(kb, (1, fan_out), jnp.float32, -bound, bound)
        return w, b

    k1, k2, k3 = jax.random.split(key, 3)
    in_dim = obs_size + out_dims
    w1, b1 = linear(k1, in_dim, hidden_size)
    w2, b2 = linear(k2, hidden_size, hidden_size)
    w3, b3 = linear(k3, hidden_size, 1)
    w3_row = w3.T                    # (1, hidden): final layer runs on the VPU
    b3 = b3.reshape((1,))            # scalar, lives in SMEM inside the kernel
    return (w1, b1, w2, b2, w3_row, b3)


def dqn_reference(state, action, params, *, matmul_dtype=jnp.float32):
    """Pure-JAX reference. With matmul_dtype=bfloat16 it mirrors the kernel's
    rounding of the MXU inputs (f32 accumulate); with float32 it is the plain
    PyTorch-semantics forward."""
    w1, b1, w2, b2, w3_row, b3 = params
    cast = lambda t: t.astype(matmul_dtype).astype(jnp.float32)
    x = cast(jnp.concatenate([state, action], axis=-1))
    h1 = jnp.maximum(x @ cast(w1) + b1, 0.0)
    h2 = jnp.maximum(cast(h1) @ cast(w2) + b2, 0.0)
    return jnp.sum(h2 * w3_row, axis=-1, keepdims=True) + b3


if __name__ == "__main__":
    # Ant-v4: obs dim 27, action dim 8; small hidden size.
    obs_size, out_dims, hidden_size = 27, 8, 32

    key = jax.random.PRNGKey(0)
    k_params, k_state, k_action = jax.random.split(key, 3)
    params = init_params(k_params, obs_size, out_dims, hidden_size)

    # Small single-tile check (batch=8).
    batch = 8
    state = jax.random.normal(k_state, (batch, obs_size), jnp.float32)
    action = jax.random.uniform(k_action, (batch, out_dims), jnp.float32, -1.0, 1.0)
    q = jax.block_until_ready(dqn_forward(state, action, params))
    assert q.shape == (batch, 1)
    q_bf = dqn_reference(state, action, params, matmul_dtype=jnp.bfloat16)
    q_f32 = dqn_reference(state, action, params, matmul_dtype=jnp.float32)
    assert jnp.allclose(q, q_bf, atol=2e-2, rtol=2e-2), "mismatch vs bf16-aware reference (small)"
    assert jnp.allclose(q, q_f32, atol=1e-1, rtol=1e-1), "mismatch vs f32 reference (small)"

    # Larger replay-style batch: exercises the batch grid (2 tiles) / pipelining.
    big_batch = 1024
    kb_s, kb_a = jax.random.split(jax.random.PRNGKey(1))
    big_state = jax.random.normal(kb_s, (big_batch, obs_size), jnp.float32)
    big_action = jax.random.uniform(kb_a, (big_batch, out_dims), jnp.float32, -1.0, 1.0)
    q_big = jax.block_until_ready(dqn_forward(big_state, big_action, params))
    assert q_big.shape == (big_batch, 1)
    qb_bf = dqn_reference(big_state, big_action, params, matmul_dtype=jnp.bfloat16)
    qb_f32 = dqn_reference(big_state, big_action, params, matmul_dtype=jnp.float32)
    assert jnp.allclose(q_big, qb_bf, atol=2e-2, rtol=2e-2), "mismatch vs bf16-aware reference (big)"
    assert jnp.allclose(q_big, qb_f32, atol=1e-1, rtol=1e-1), "mismatch vs f32 reference (big)"

    print("KERNEL_OK")
</pallas_src>

<mosaic_0001>
module attributes {stable_mosaic.version = 11 : i64} {
  func.func @dqn_kernel(%arg0: i32, %arg1: memref<8x27xbf16, #tpu.memory_space<vmem>>, %arg2: memref<8x8xbf16, #tpu.memory_space<vmem>>, %arg3: memref<35x32xbf16, #tpu.memory_space<vmem>>, %arg4: memref<1x32xf32, #tpu.memory_space<vmem>>, %arg5: memref<32x32xbf16, #tpu.memory_space<vmem>>, %arg6: memref<1x32xf32, #tpu.memory_space<vmem>>, %arg7: memref<1x32xf32, #tpu.memory_space<vmem>>, %arg8: memref<1xf32, #tpu.memory_space<smem>>, %arg9: memref<8x1xf32, #tpu.memory_space<vmem>>, %arg10: memref<8x35xbf16, #tpu.memory_space<vmem>>) attributes {dimension_semantics = [#tpu.dimension_semantics<parallel>], iteration_bounds = array<i64: 1>, scalar_prefetch = 0 : i64, scratch_operands = 1 : i64, tpu.core_type = #tpu.core_type<tc>, window_params = [{transform_indices = @transform_0, window_bounds = array<i64: 8, 27>}, {transform_indices = @transform_1, window_bounds = array<i64: 8, 8>}, {pipeline_mode = #tpu.pipeline_mode<synchronous>, transform_indices = @transform_2, window_bounds = array<i64: 35, 32>}, {pipeline_mode = #tpu.pipeline_mode<synchronous>, transform_indices = @transform_3, window_bounds = array<i64: 1, 32>}, {pipeline_mode = #tpu.pipeline_mode<synchronous>, transform_indices = @transform_4, window_bounds = array<i64: 32, 32>}, {pipeline_mode = #tpu.pipeline_mode<synchronous>, transform_indices = @transform_5, window_bounds = array<i64: 1, 32>}, {pipeline_mode = #tpu.pipeline_mode<synchronous>, transform_indices = @transform_6, window_bounds = array<i64: 1, 32>}, {transform_indices = @transform_7, window_bounds = array<i64: 1>}, {transform_indices = @transform_8, window_bounds = array<i64: 8, 1>}]} {
    %c0 = arith.constant 0 : index
    %c0_0 = arith.constant 0 : index
    %0 = vector.load %arg1[%c0, %c0_0] : memref<8x27xbf16, #tpu.memory_space<vmem>>, vector<8x27xbf16>
    %c0_1 = arith.constant 0 : index
    %c0_2 = arith.constant 0 : index
    %1 = vector.load %arg10[%c0_1, %c0_2] : memref<8x35xbf16, #tpu.memory_space<vmem>>, vector<8x27xbf16>
    tpu.vector_store %arg10[%c0_1, %c0_2], %0 {strides = array<i32>} : memref<8x35xbf16, #tpu.memory_space<vmem>>, vector<8x27xbf16>,
    %c0_3 = arith.constant 0 : index
    %c0_4 = arith.constant 0 : index
    %2 = vector.load %arg2[%c0_3, %c0_4] : memref<8x8xbf16, #tpu.memory_space<vmem>>, vector<8x8xbf16>
    %c0_5 = arith.constant 0 : index
    %c27 = arith.constant 27 : index
    %3 = vector.load %arg10[%c0_5, %c27] : memref<8x35xbf16, #tpu.memory_space<vmem>>, vector<8x8xbf16>
    tpu.vector_store %arg10[%c0_5, %c27], %2 {strides = array<i32>} : memref<8x35xbf16, #tpu.memory_space<vmem>>, vector<8x8xbf16>,
    %c0_6 = arith.constant 0 : index
    %c0_7 = arith.constant 0 : index
    %4 = vector.load %arg10[%c0_6, %c0_7] : memref<8x35xbf16, #tpu.memory_space<vmem>>, vector<8x35xbf16>
    %c0_8 = arith.constant 0 : index
    %c0_9 = arith.constant 0 : index
    %5 = vector.load %arg3[%c0_8, %c0_9] : memref<35x32xbf16, #tpu.memory_space<vmem>>, vector<35x32xbf16>
    %cst = arith.constant dense<0.000000e+00> : vector<8x32xf32>
    %6 = tpu.matmul %4, %5, %cst {dimension_numbers = #tpu.dot_dimension_numbers<[1], [0], [0], [1], [0, 0, 1, 1], [], []>} : vector<8x35xbf16>, vector<35x32xbf16>, vector<8x32xf32> -> vector<8x32xf32>
    %c0_10 = arith.constant 0 : index
    %c0_11 = arith.constant 0 : index
    %7 = vector.load %arg4[%c0_10, %c0_11] : memref<1x32xf32, #tpu.memory_space<vmem>>, vector<1x32xf32>
    %8 = vector.broadcast %7 : vector<1x32xf32> to vector<8x32xf32>
    %9 = arith.addf %6, %8 : vector<8x32xf32>
    %cst_12 = arith.constant 0.000000e+00 : f32
    %10 = vector.broadcast %cst_12 : f32 to vector<8x32xf32>
    %11 = arith.maximumf %9, %10 : vector<8x32xf32>
    %12 = arith.truncf %11 : vector<8x32xf32> to vector<8x32xbf16>
    %c0_13 = arith.constant 0 : index
    %c0_14 = arith.constant 0 : index
    %13 = vector.load %arg5[%c0_13, %c0_14] : memref<32x32xbf16, #tpu.memory_space<vmem>>, vector<32x32xbf16>
    %cst_15 = arith.constant dense<0.000000e+00> : vector<8x32xf32>
    %14 = tpu.matmul %12, %13, %cst_15 {dimension_numbers = #tpu.dot_dimension_numbers<[1], [0], [0], [1], [0, 0, 1, 1], [], []>} : vector<8x32xbf16>, vector<32x32xbf16>, vector<8x32xf32> -> vector<8x32xf32>
    %c0_16 = arith.constant 0 : index
    %c0_17 = arith.constant 0 : index
    %15 = vector.load %arg6[%c0_16, %c0_17] : memref<1x32xf32, #tpu.memory_space<vmem>>, vector<1x32xf32>
    %16 = vector.broadcast %15 : vector<1x32xf32> to vector<8x32xf32>
    %17 = arith.addf %14, %16 : vector<8x32xf32>
    %cst_18 = arith.constant 0.000000e+00 : f32
    %18 = vector.broadcast %cst_18 : f32 to vector<8x32xf32>
    %19 = arith.maximumf %17, %18 : vector<8x32xf32>
    %c0_19 = arith.constant 0 : index
    %c0_20 = arith.constant 0 : index
    %20 = vector.load %arg7[%c0_19, %c0_20] : memref<1x32xf32, #tpu.memory_space<vmem>>, vector<1x32xf32>
    %21 = vector.broadcast %20 : vector<1x32xf32> to vector<8x32xf32>
    %22 = arith.mulf %19, %21 : vector<8x32xf32>
    %cst_21 = arith.constant dense<0.000000e+00> : vector<8xf32>
    %23 = vector.multi_reduction <add>, %22, %cst_21 [1] : vector<8x32xf32> to vector<8xf32>
    %24 = vector.shape_cast %23 : vector<8xf32> to vector<8x1xf32>
    %c0_22 = arith.constant 0 : index
    %25 = memref.load %arg8[%c0_22] : memref<1xf32, #tpu.memory_space<smem>>
    %26 = vector.broadcast %25 : f32 to vector<8x1xf32>
    %27 = arith.addf %24, %26 : vector<8x1xf32>
    %c0_23 = arith.constant 0 : index
    %c0_24 = arith.constant 0 : index
    %28 = vector.load %arg9[%c0_23, %c0_24] : memref<8x1xf32, #tpu.memory_space<vmem>>, vector<8x1xf32>
    tpu.vector_store %arg9[%c0_23, %c0_24], %27 {strides = array<i32>} : memref<8x1xf32, #tpu.memory_space<vmem>>, vector<8x1xf32>,
    return
  }
  func.func @transform_0(%arg0: i32) -> (i32, i32) {
    %c0_i32 = arith.constant 0 : i32
    %c0_i32_0 = arith.constant 0 : i32
    return %arg0, %c0_i32 : i32, i32
  }
  func.func @transform_1(%arg0: i32) -> (i32, i32) {
    %c0_i32 = arith.constant 0 : i32
    %c0_i32_0 = arith.constant 0 : i32
    return %arg0, %c0_i32 : i32, i32
  }
  func.func @transform_2(%arg0: i32) -> (i32, i32) {
    %c0_i32 = arith.constant 0 : i32
    %c0_i32_0 = arith.constant 0 : i32
    %c0_i32_1 = arith.constant 0 : i32
    return %c0_i32, %c0_i32_0 : i32, i32
  }
  func.func @transform_3(%arg0: i32) -> (i32, i32) {
    %c0_i32 = arith.constant 0 : i32
    %c0_i32_0 = arith.constant 0 : i32
    %c0_i32_1 = arith.constant 0 : i32
    return %c0_i32, %c0_i32_0 : i32, i32
  }
  func.func @transform_4(%arg0: i32) -> (i32, i32) {
    %c0_i32 = arith.constant 0 : i32
    %c0_i32_0 = arith.constant 0 : i32
    %c0_i32_1 = arith.constant 0 : i32
    return %c0_i32, %c0_i32_0 : i32, i32
  }
  func.func @transform_5(%arg0: i32) -> (i32, i32) {
    %c0_i32 = arith.constant 0 : i32
    %c0_i32_0 = arith.constant 0 : i32
    %c0_i32_1 = arith.constant 0 : i32
    return %c0_i32, %c0_i32_0 : i32, i32
  }
  func.func @transform_6(%arg0: i32) -> (i32, i32) {
    %c0_i32 = arith.constant 0 : i32
    %c0_i32_0 = arith.constant 0 : i32
    %c0_i32_1 = arith.constant 0 : i32
    return %c0_i32, %c0_i32_0 : i32, i32
  }
  func.func @transform_7(%arg0: i32) -> i32 {
    %c0_i32 = arith.constant 0 : i32
    %c0_i32_0 = arith.constant 0 : i32
    return %c0_i32 : i32
  }
  func.func @transform_8(%arg0: i32) -> (i32, i32) {
    %c0_i32 = arith.constant 0 : i32
    %c0_i32_0 = arith.constant 0 : i32
    return %arg0, %c0_i32 : i32, i32
  }
}

</mosaic_0001>

<llo_original>
// kernel: tpu_custom_call.1
$region0: #{tpu_custom_call.1}
  #allocation0 [shape = 'u32[]', space=smem, size = 0x4, offset = 0x4, fixed_abs, tag = 'smem constant byte address 0x4 - core index']
  #allocation1 [shape = 'u32[144,128]{1,0:T(1,128)}', space=vmem, size = 0x12000, scoped, tag = 'internal scratch']
  #allocation2 [shape = 'bf16[8,35]{1,0:T(8,128)(2,1)}', space=vmem, size = 0x800, scoped, tag = 'scratch operand']
  #allocation3 [shape = 'f32[1]{0:T(128)S(6)}', space=smem, size = 0x200, scoped, tag = 'scoped memory for tpu_custom_call.1']
  %s0 = inlined_call_operand.vmem [shape: bf16[8,27], index: 0, kind: input, shape index: {}]
  %s1 = inlined_call_operand.vmem [shape: bf16[8,8], index: 1, kind: input, shape index: {}]
  %s2 = inlined_call_operand.vmem [shape: bf16[35,32], index: 2, kind: input, shape index: {}]
  %s3 = inlined_call_operand.vmem [shape: f32[1,32], index: 3, kind: input, shape index: {}]
  %s4 = inlined_call_operand.vmem [shape: bf16[32,32], index: 4, kind: input, shape index: {}]
  %s5 = inlined_call_operand.vmem [shape: f32[1,32], index: 5, kind: input, shape index: {}]
  %s6 = inlined_call_operand.vmem [shape: f32[1,32], index: 6, kind: input, shape index: {}]
  %s7 = inlined_call_operand.<no memory space> [shape: f32[1], index: 7, kind: input, shape index: {}]
  %s8 = inlined_call_operand.vmem [shape: f32[8,1], index: 8, kind: output, shape index: {}]
  %s9 = sld [smem:[#allocation0]]
  $region42: #{tpu_custom_call.1} parent=0
    _
  %s11 = ssub.s32 1, %s9
  %s12 = scalar_select 0, %s11, %s9
  %13 = sst [smem:[#allocation3]] %s7
  // Predicated region
  $region2: #{tpu_custom_call.1} parent=0 // pred_check
    _
  $region3: #{tpu_custom_call.1} parent=0 // pred_check_branch
    %15 = sbr.rel (0) target = $region5
  $region4: #{tpu_custom_call.1} parent=0 // pred_region
    _
  $region5: #{tpu_custom_call.1} parent=0 // pred_fallthru
    _
  // Predicated region
  $region6: #{tpu_custom_call.1} parent=0 // pred_check
    _
  $region7: #{tpu_custom_call.1} parent=0 // pred_check_branch
    %17 = sbr.rel (0) target = $region9
  $region8: #{tpu_custom_call.1} parent=0 // pred_region
    _
  $region9: #{tpu_custom_call.1} parent=0 // pred_fallthru
    _
  // Predicated region
  $region10: #{tpu_custom_call.1} parent=0 // pred_check
    _
  $region11: #{tpu_custom_call.1} parent=0 // pred_check_branch
    %19 = sbr.rel (0) target = $region13
  $region12: #{tpu_custom_call.1} parent=0 // pred_region
    _
  $region13: #{tpu_custom_call.1} parent=0 // pred_fallthru
    _
  // Predicated region
  $region14: #{tpu_custom_call.1} parent=0 // pred_check
    _
  $region15: #{tpu_custom_call.1} parent=0 // pred_check_branch
    %21 = sbr.rel (0) target = $region17
  $region16: #{tpu_custom_call.1} parent=0 // pred_region
    _
  $region17: #{tpu_custom_call.1} parent=0 // pred_fallthru
    _
  // Predicated region
  $region18: #{tpu_custom_call.1} parent=0 // pred_check
    _
  $region19: #{tpu_custom_call.1} parent=0 // pred_check_branch
    %23 = sbr.rel (0) target = $region21
  $region20: #{tpu_custom_call.1} parent=0 // pred_region
    _
  $region21: #{tpu_custom_call.1} parent=0 // pred_fallthru
    _
  // Predicated region
  $region22: #{tpu_custom_call.1} parent=0 // pred_check
    _
  $region23: #{tpu_custom_call.1} parent=0 // pred_check_branch
    %25 = sbr.rel (0) target = $region25
  $region24: #{tpu_custom_call.1} parent=0 // pred_region
    _
  $region25: #{tpu_custom_call.1} parent=0 // pred_fallthru
    _
  // Predicated region
  $region26: #{tpu_custom_call.1} parent=0 // pred_check
    _
  $region27: #{tpu_custom_call.1} parent=0 // pred_check_branch
    %27 = sbr.rel (0) target = $region29
  $region28: #{tpu_custom_call.1} parent=0 // pred_region
    _
  $region29: #{tpu_custom_call.1} parent=0 // pred_fallthru
    _
  // Predicated region
  $region30: #{tpu_custom_call.1} parent=0 // pred_check
    _
  $region31: #{tpu_custom_call.1} parent=0 // pred_check_branch
    %29 = sbr.rel (0) target = $region33
  $region32: #{tpu_custom_call.1} parent=0 // pred_region
    _
  $region33: #{tpu_custom_call.1} parent=0 // pred_fallthru
    _
  %v31 = vld [vmem:[%s0] sm:$0xf]
  %vm32 = vcmask 216064
  %33 = vst.msk [vmem:[#allocation2] sm:$0xf] %vm32, %v31
  %v34 = vld [vmem:[%s1] sm:$0xf]
  %36 = vrot.lane.b32.xlu0 %v34, 27
  %v37 = vpop.permute.xlu0 %36
  %vm39 = vcmask 281816
  %40 = vst.msk [vmem:[#allocation2] sm:$0xf] %vm39, %v37
  %v41 = vld [vmem:[#allocation2] sm:$0xf]
  %v42 = vld [vmem:[%s2] sm:$0xf]
  %v43 = vld [vmem:[%s2 + $0x4] sm:$0xf]
  %v44 = vld [vmem:[%s2 + $0x8] sm:$0xf]
  %v45 = vld [vmem:[%s2 + $0xc] sm:$0xf]
  %v46 = vld [vmem:[%s2 + $0x10] sm:$0x3]
  %v47 = vld [vmem:[%s3] sm:$0x1]
  %v49 = vlaneseq
  %v50 = vshrl.u32 %v49, 7
  %v51 = vsub.s32 0, %v50
  %v52 = vrot.slane %v47, %v51
  %v59 = vunpack.c.l.b16 %v42
  %v60 = vunpack.c.l.b16 %v43
  %v61 = vunpack.c.l.b16 %v44
  %v62 = vunpack.c.l.b16 %v45
  %v63 = vunpack.c.l.b16 %v46
  %v64 = vpack.c.b16 %v60, %v59
  %v65 = vpack.c.b16 %v62, %v61
  %v66 = vpack.c.b16 %v63, %v63
  %vm69 = vcmask 285696
  %v71 = vsel %vm69, %v41, 0
  %vm73 = vcmask 1040384
  %vm74 = vcmask 1041408
  %v75 = vsel %vm73, 4294967295, 65535
  %v76 = vsel %vm74, %v75, 0
  %v78 = vand.u32 %v66, %v76
  %80 = vmatprep.subr.bf16.mxu0 0
  %81 = vmatpush1.bf16.msra.mxu0 0
  %82 = vmatprep.subr.bf16.mxu0 0
  %83 = vmatpush1.bf16.msra.mxu0 0
  %84 = vmatprep.subr.bf16.mxu0 0
  %85 = vmatpush1.bf16.msra.mxu0 0
  %86 = vmatprep.subr.bf16.mxu0 0
  %87 = vmatpush1.bf16.msra.mxu0 0
  %88 = vmatprep.subr.bf16.mxu0 0
  %89 = vmatpush1.bf16.msra.mxu0 0
  %90 = vmatprep.subr.bf16.mxu0 0
  %91 = vmatpush1.bf16.msra.mxu0 %v78
  %92 = vmatprep.subr.bf16.mxu0 0
  %93 = vmatpush1.bf16.msra.mxu0 %v65
  %94 = vmatprep.subr.bf16.mxu0 0
  %95 = vmatpush1.bf16.msra.mxu0 %v64
  %96 = vmatprep.subr.bf16.mxu0 0
  %97 = vmatpush2.bf16.msra.mxu0 0
  %98 = vmatprep.subr.bf16.mxu0 0
  %99 = vmatpush2.bf16.msra.mxu0 0
  %100 = vmatprep.subr.bf16.mxu0 0
  %101 = vmatpush2.bf16.msra.mxu0 0
  %102 = vmatprep.subr.bf16.mxu0 0
  %103 = vmatpush2.bf16.msra.mxu0 0
  %104 = vmatprep.subr.bf16.mxu0 0
  %105 = vmatpush2.bf16.msra.mxu0 0
  %106 = vmatprep.subr.bf16.mxu0 0
  %107 = vmatpush2.bf16.msra.mxu0 0
  %108 = vmatprep.subr.bf16.mxu0 0
  %109 = vmatpush2.bf16.msra.mxu0 0
  %110 = vmatprep.subr.bf16.mxu0 0
  %111 = vmatpush2.bf16.msra.mxu0 0
  %112 = vmatprep.mubr.bf16.mxu0 0
  %113 = vmatmul.mubr.bf16.gmra.mxu0 %v71
  %v114 = vpop.f32.mrf.mxu0
  %v115 = vadd.f32 %v52, %v114
  %v116 = vpop.f32.mrf.mxu0
  %v117 = vpop.f32.mrf.mxu0
  %v118 = vpop.f32.mrf.mxu0
  %119 = vdwg.mxu0
  %v120 = vmax.f32 %v115, 0.0
  %v121 = vpack.c.bf16 %v120, %v120
  %v122 = vld [vmem:[%s4] sm:$0xf]
  %v123 = vld [vmem:[%s4 + $0x4] sm:$0xf]
  %v124 = vld [vmem:[%s4 + $0x8] sm:$0xf]
  %v125 = vld [vmem:[%s4 + $0xc] sm:$0xf]
  %v126 = vld [vmem:[%s5] sm:$0x1]
  %v128 = vlaneseq
  %v129 = vshrl.u32 %v128, 7
  %v130 = vsub.s32 0, %v129
  %v131 = vrot.slane %v126, %v130
  %v137 = vunpack.c.l.b16 %v122
  %v138 = vunpack.c.l.b16 %v123
  %v139 = vunpack.c.l.b16 %v124
  %v140 = vunpack.c.l.b16 %v125
  %v141 = vpack.c.b16 %v138, %v137
  %v142 = vpack.c.b16 %v140, %v139
  %vm145 = vcmask 261120
  %v147 = vsel %vm145, %v121, 0
  %149 = vmatprep.subr.bf16.mxu0 0
  %150 = vmatpush1.bf16.msra.mxu0 0
  %151 = vmatprep.subr.bf16.mxu0 0
  %152 = vmatpush1.bf16.msra.mxu0 0
  %153 = vmatprep.subr.bf16.mxu0 0
  %154 = vmatpush1.bf16.msra.mxu0 0
  %155 = vmatprep.subr.bf16.mxu0 0
  %156 = vmatpush1.bf16.msra.mxu0 0
  %157 = vmatprep.subr.bf16.mxu0 0
  %158 = vmatpush1.bf16.msra.mxu0 0
  %159 = vmatprep.subr.bf16.mxu0 0
  %160 = vmatpush1.bf16.msra.mxu0 0
  %161 = vmatprep.subr.bf16.mxu0 0
  %162 = vmatpush1.bf16.msra.mxu0 %v142
  %163 = vmatprep.subr.bf16.mxu0 0
  %164 = vmatpush1.bf16.msra.mxu0 %v141
  %165 = vmatprep.subr.bf16.mxu0 0
  %166 = vmatpush2.bf16.msra.mxu0 0
  %167 = vmatprep.subr.bf16.mxu0 0
  %168 = vmatpush2.bf16.msra.mxu0 0
  %169 = vmatprep.subr.bf16.mxu0 0
  %170 = vmatpush2.bf16.msra.mxu0 0
  %171 = vmatprep.subr.bf16.mxu0 0
  %172 = vmatpush2.bf16.msra.mxu0 0
  %173 = vmatprep.subr.bf16.mxu0 0
  %174 = vmatpush2.bf16.msra.mxu0 0
  %175 = vmatprep.subr.bf16.mxu0 0
  %176 = vmatpush2.bf16.msra.mxu0 0
  %177 = vmatprep.subr.bf16.mxu0 0
  %178 = vmatpush2.bf16.msra.mxu0 0
  %179 = vmatprep.subr.bf16.mxu0 0
  %180 = vmatpush2.bf16.msra.mxu0 0
  %181 = vmatprep.mubr.bf16.mxu0 0
  %182 = vmatmul.mubr.bf16.gmra.mxu0 %v147
  %v183 = vpop.f32.mrf.mxu0
  %v184 = vadd.f32 %v131, %v183
  %v185 = vpop.f32.mrf.mxu0
  %v186 = vpop.f32.mrf.mxu0
  %v187 = vpop.f32.mrf.mxu0
  %188 = vdwg.mxu0
  %v189 = vmax.f32 %v184, 0.0
  %v190 = vld [vmem:[%s6] sm:$0x1]
  %v192 = vlaneseq
  %v193 = vshrl.u32 %v192, 7
  %v194 = vsub.s32 0, %v193
  %v195 = vrot.slane %v190, %v194
  %v197 = vmul.f32 %v189, %v195
  %v198 = vsel %vm145, %v197, 0.0
  %199 = vadd.xlane.f32.xlu0 %v198
  %v200 = vpop.xlane.xlu0 %199
  %s201 = sld [smem:[#allocation3]]
  %v202 = vstv %s201
  %v203 = vadd.f32 %v200, %v202
  %vm204 = vcmask 7168
  %205 = vst.msk [vmem:[%s8] sm:$0xff] %vm204, %v203
  // Predicated region
  $region34: #{tpu_custom_call.1} parent=0 // pred_check
    _
  $region35: #{tpu_custom_call.1} parent=0 // pred_check_branch
    %207 = sbr.rel (0) target = $region37
  $region36: #{tpu_custom_call.1} parent=0 // pred_region
    _
  $region37: #{tpu_custom_call.1} parent=0 // pred_fallthru
    _
  // Predicated region
  $region38: #{tpu_custom_call.1} parent=0 // pred_check
    _
  $region39: #{tpu_custom_call.1} parent=0 // pred_check_branch
    %209 = sbr.rel (0) target = $region41
  $region40: #{tpu_custom_call.1} parent=0 // pred_region
    _
  $region41: #{tpu_custom_call.1} parent=0 // pred_fallthru
    _

</llo_original>
